<compile_context>
chip_gen: v7x
topology: tpu7x:2x2x1
jax: 0.10.0
libtpu: 0.0.40
codegen_flags: <defaults>
</compile_context>

<pallas_src>
import functools

import jax
import jax.numpy as jnp
from jax import lax
from jax.experimental import pallas as pl
from jax.experimental.pallas import tpu as pltpu


def _round_up(x, m):
    return ((x + m - 1) // m) * m


def _pick_tiling(batch, *, max_chunk_cols=256, max_chunks_per_block=8):
    """Lane-friendly batch tiling.

    Returns (chunk_cols, chunks_per_block, padded_batch):
      chunk_cols       columns per inner-loop step (multiple of 128; bounds
                       vreg pressure — the batch-major layer-0 operand is
                       chunk/8 vregs),
      chunks_per_block inner chunks per grid step (amortizes grid overhead),
      padded_batch     batch rounded up so the grid divides evenly.
    Keeps >= 2 grid steps when there is enough work so both v7x TensorCores
    get tiles; on v5e/v6e (1 TC) the extra step is harmless.
    """
    b128 = _round_up(max(int(batch), 1), 128)
    chunk = min(_round_up(max_chunk_cols, 128), b128)
    n_chunks = pl.cdiv(b128, chunk)
    cpb = min(max_chunks_per_block, n_chunks)
    if n_chunks >= 2:
        cpb = min(cpb, pl.cdiv(n_chunks, 2))     # leave >= 2 grid steps (v7x)
    cpb = max(cpb, 1)
    padded = _round_up(b128, chunk * cpb)
    return chunk, cpb, padded


def _h1_kernel(x_ref, s_ref, wt_ref, b_ref, out_ref, *, n_layers, nf,
               chunks_per_block, unroll_layers):
    """Full H1 forward for one batch block.

    x_ref   : (chunks_per_block, chunk, nf)  batch-major input rows
    s_ref   : (L, 2*nf, nf)                  per-layer stacked [K_j^T ; A^T]
    wt_ref  : (L, nf, nf)                    per-layer h * F_NN @ K_j
    b_ref   : (L, nf, 1)                     per-layer bias column
    out_ref : (chunks_per_block, nf, chunk)  lane-dense output (batch on lanes)
    """

    def apply_layer(j, Yt, *, first):
        Sj = s_ref[j]                                    # (2nf, nf)
        Wj = wt_ref[j]                                   # (nf, nf)
        bj = b_ref[j]                                    # (nf, 1)
        if first:
            # Layer 0 consumes the batch-major rows directly: S_0 @ X^T via an
            # NT dot_general (contract the feature axis of both operands), so
            # the layout change to lane-dense is folded into the MXU op — no
            # host-side XLA transpose and no in-kernel relayout.
            C = lax.dot_general(Sj, Yt, (((1,), (1,)), ((), ())),
                                preferred_element_type=jnp.float32)
        else:
            C = jnp.dot(Sj, Yt, preferred_element_type=jnp.float32)
        # C rows [0:nf)   = K_j^T @ Yt   (pre-activation)
        # C rows [nf:2nf) = A^T   @ Yt   (residual + damping term, h pre-folded)
        # TODO(synk): prototype a VPU/FMA formulation (stride-0 sublane
        # broadcasts of Yt rows against weight columns) to move this 8-deep
        # contraction off the MXU push/pop cadence; measure before committing.
        inner = jnp.tanh(C[:nf, :] + bj)                 # bias lane-broadcasts
        return C[nf:, :] + jnp.dot(Wj, inner,
                                   preferred_element_type=jnp.float32)

    def one_chunk(c, carry):
        Xc = x_ref[c].astype(jnp.float32)                # (chunk, nf)
        Yt = apply_layer(0, Xc, first=True)              # (nf, chunk) lane-dense
        if unroll_layers:                                # small L: static unroll
            for j in range(1, n_layers):
                Yt = apply_layer(j, Yt, first=False)
        else:                                            # large L: bounded code
            Yt = lax.fori_loop(1, n_layers,
                               lambda j, y: apply_layer(j, y, first=False), Yt)
        out_ref[c] = Yt.astype(out_ref.dtype)            # full (8,128)-tile vst
        return carry

    lax.fori_loop(0, chunks_per_block, one_chunk, 0)


def h1_prefold(K, b, J, r, M, n_layers, t_end):
    """Fold the layer-invariant algebra once (keep it off the per-step hot path)."""
    nf = K.shape[0]
    h = float(t_end) / float(n_layers)
    I = jnp.eye(nf, dtype=jnp.float32)
    F_NN = jnp.asarray(J, jnp.float32) - jnp.asarray(r, jnp.float32) * I
    Mf = jnp.asarray(M, jnp.float32)
    MtM = Mf.T @ Mf
    At = I + h * (F_NN @ MtM.T)                 # A^T, with A = I + h*MtM@F_NN^T
    K_l = jnp.transpose(K, (2, 0, 1)).astype(jnp.float32)    # (L, nf, nf)  K_j
    Kt_l = jnp.transpose(K, (2, 1, 0)).astype(jnp.float32)   # (L, nf, nf)  K_j^T
    Wt_l = h * jnp.einsum('ik,lkj->lij', F_NN, K_l)          # (L, nf, nf)
    S_l = jnp.concatenate(
        [Kt_l, jnp.broadcast_to(At, (n_layers, nf, nf))], axis=1)   # (L, 2nf, nf)
    b_l = jnp.transpose(b, (2, 0, 1)).astype(jnp.float32)    # (L, nf, 1)
    return S_l, Wt_l, b_l


def h1_apply(Y0, S_l, Wt_l, b_l, *, n_layers, lane_major_output=False,
             max_chunk_cols=256, max_chunks_per_block=8):
    """Run the H1 stack on 2-D activations Y0:(B, nf) with pre-folded weights."""
    nf = S_l.shape[-1]
    B = Y0.shape[0]
    assert Y0.ndim == 2 and Y0.shape[1] == nf, Y0.shape

    chunk, cpb, b_pad = _pick_tiling(
        B, max_chunk_cols=max_chunk_cols,
        max_chunks_per_block=max_chunks_per_block)
    n_chunks = b_pad // chunk
    grid = (n_chunks // cpb,)

    # Zero-pad the batch (tanh is bounded; padded rows are sliced off below)
    # and view it as (n_chunks, chunk, nf): a free contiguous reshape — no
    # host-side transpose, fully contiguous HBM reads per block.
    Yp = jnp.pad(Y0, ((0, b_pad - B), (0, 0))) if b_pad != B else Y0
    Xr = Yp.reshape(n_chunks, chunk, nf)

    kernel = functools.partial(
        _h1_kernel, n_layers=n_layers, nf=nf, chunks_per_block=cpb,
        unroll_layers=(n_layers <= 8))

    # Weights: whole-array VMEM residents (constant across the grid -> no
    # per-step double-buffering / revisit bookkeeping).
    resident = pl.BlockSpec(memory_space=pltpu.MemorySpace.VMEM)

    outT = pl.pallas_call(
        kernel,
        out_shape=jax.ShapeDtypeStruct((n_chunks, nf, chunk), Y0.dtype),
        grid_spec=pltpu.PrefetchScalarGridSpec(
            num_scalar_prefetch=0,
            grid=grid,
            in_specs=[
                pl.BlockSpec((cpb, chunk, nf), lambda i: (i, 0, 0)),  # activations
                resident,   # S_l  = [K^T ; A^T]
                resident,   # Wt_l = h * F_NN @ K
                resident,   # b_l
            ],
            out_specs=pl.BlockSpec((cpb, nf, chunk), lambda i: (i, 0, 0)),
        ),
        compiler_params=pltpu.CompilerParams(
            dimension_semantics=("parallel",)),
    )(Xr, S_l, Wt_l, b_l)

    if lane_major_output:
        # Lane-dense (nf, B): free when there is a single chunk, otherwise one
        # leading-axis swap (no per-element layout work inside the kernel).
        if n_chunks == 1:
            return outT.reshape(nf, b_pad)[:, :B]
        return jnp.transpose(outT, (1, 0, 2)).reshape(nf, b_pad)[:, :B]
    # Module contract is (B, nf): single layout pass, done outside the kernel
    # so in-kernel stores stay full-lane (v5e store-slot friendly).
    return jnp.transpose(outT, (0, 2, 1)).reshape(b_pad, nf)[:B]


@functools.partial(jax.jit,
                   static_argnames=("n_layers", "t_end", "lane_major_output"))
def h1_forward(Y0, K, b, J, r, M, n_layers, t_end, lane_major_output=False):
    """Jitted convenience wrapper: pre-fold + apply.

    In a training/inference loop, call h1_prefold once per weight update and
    reuse (S_l, Wt_l, b_l) with h1_apply to keep the fold off the hot path.
    """
    S_l, Wt_l, b_l = h1_prefold(K, b, J, r, M, n_layers, t_end)
    return h1_apply(Y0, S_l, Wt_l, b_l, n_layers=n_layers,
                    lane_major_output=lane_major_output)


def h1_reference(Y0, K, b, J, r, M, n_layers, t_end):
    """Pure-JAX reference mirroring the PyTorch forward (2-D input, un-folded)."""
    h = float(t_end) / float(n_layers)
    nf = K.shape[0]
    I = jnp.eye(nf, dtype=jnp.float32)
    F_NN = jnp.asarray(J, jnp.float32) - jnp.asarray(r, jnp.float32) * I
    Mf = jnp.asarray(M, jnp.float32)
    MtM = Mf.T @ Mf
    Y = Y0.astype(jnp.float32)
    for j in range(n_layers):
        Kj = K[:, :, j].astype(jnp.float32)
        bj = b[:, 0, j].astype(jnp.float32)
        inner = Y @ Kj + bj[None, :]
        Y = Y + h * (jnp.tanh(inner) @ (F_NN @ Kj).T) + h * ((Y @ MtM) @ F_NN.T)
    return Y


if __name__ == "__main__":
    def build_params(key, nf, n_layers):
        # Deterministic "random=True" init: K ~ N(0,1), b ~ N(0,1), M = 0.2*I, r = 0.
        k_K, k_b = jax.random.split(key)
        K = jax.random.normal(k_K, (nf, nf, n_layers), dtype=jnp.float32)
        b = jax.random.normal(k_b, (nf, 1, n_layers), dtype=jnp.float32)
        M = 0.2 * jnp.eye(nf, dtype=jnp.float32)
        r = jnp.float32(0.0)
        half = nf // 2
        j_id = jnp.eye(half, dtype=jnp.float32)
        j_zz = jnp.zeros((half, half), dtype=jnp.float32)
        J = jnp.concatenate(
            (jnp.concatenate((j_zz, j_id), axis=0),
             jnp.concatenate((-j_id, j_zz), axis=0)), axis=1)
        return K, b, J, r, M

    key = jax.random.PRNGKey(0)
    k1, k2, ky1, ky2 = jax.random.split(key, 4)

    # ---- Config 1: toy size (static layer unroll, single 128-lane tile) ----
    nf, L, t_end, B = 8, 4, 1.0, 32
    K, b, J, r, M = build_params(k1, nf, L)
    Y0 = jax.random.normal(ky1, (B, nf), dtype=jnp.float32)

    out = jax.block_until_ready(
        h1_forward(Y0, K, b, J, r, M, n_layers=L, t_end=t_end))
    ref = h1_reference(Y0, K, b, J, r, M, L, t_end)
    assert out.shape == (B, nf)
    assert float(jnp.max(jnp.abs(out - ref))) < 5e-4, "config-1 mismatch"

    # Lane-major (nf, B) output path — callers that consume the transposed
    # layout skip the final host-side transpose entirely.
    out_lm = jax.block_until_ready(
        h1_forward(Y0, K, b, J, r, M, n_layers=L, t_end=t_end,
                   lane_major_output=True))
    assert out_lm.shape == (nf, B)
    assert float(jnp.max(jnp.abs(out_lm.T - ref))) < 5e-4, "lane-major mismatch"

    # ---- Config 2: deeper / wider — exercises the fori_loop layer path, the
    # multi-chunk inner loop and a >=2-step grid (v7x dual-TC sharding). ----
    L2, B2 = 12, 1280
    K2, b2, J2, r2, M2 = build_params(k2, nf, L2)
    Y02 = jax.random.normal(ky2, (B2, nf), dtype=jnp.float32)
    out2 = jax.block_until_ready(
        h1_forward(Y02, K2, b2, J2, r2, M2, n_layers=L2, t_end=t_end))
    ref2 = h1_reference(Y02, K2, b2, J2, r2, M2, L2, t_end)
    assert out2.shape == (B2, nf)
    assert float(jnp.max(jnp.abs(out2 - ref2))) < 2e-3, "config-2 mismatch"

    print("KERNEL_OK")
</pallas_src>

<mosaic_0001>
module attributes {stable_mosaic.version = 11 : i64} {
  func.func @_h1_kernel(%arg0: i32, %arg1: memref<1x128x8xf32, #tpu.memory_space<vmem>>, %arg2: memref<4x16x8xf32, #tpu.memory_space<vmem>>, %arg3: memref<4x8x8xf32, #tpu.memory_space<vmem>>, %arg4: memref<4x8x1xf32, #tpu.memory_space<vmem>>, %arg5: memref<1x8x128xf32, #tpu.memory_space<vmem>>) attributes {dimension_semantics = [#tpu.dimension_semantics<parallel>], iteration_bounds = array<i64: 1>, scalar_prefetch = 0 : i64, scratch_operands = 0 : i64, tpu.core_type = #tpu.core_type<tc>, window_params = [{transform_indices = @transform_0, window_bounds = array<i64: 1, 128, 8>}, {pipeline_mode = #tpu.pipeline_mode<synchronous>, transform_indices = @transform_1, window_bounds = array<i64: 4, 16, 8>}, {pipeline_mode = #tpu.pipeline_mode<synchronous>, transform_indices = @transform_2, window_bounds = array<i64: 4, 8, 8>}, {pipeline_mode = #tpu.pipeline_mode<synchronous>, transform_indices = @transform_3, window_bounds = array<i64: 4, 8, 1>}, {transform_indices = @transform_4, window_bounds = array<i64: 1, 8, 128>}]} {
    %c0_i32 = arith.constant 0 : i32
    %0 = arith.index_cast %c0_i32 : i32 to index
    %c0 = arith.constant 0 : index
    %c0_0 = arith.constant 0 : index
    %1 = vector.load %arg1[%0, %c0, %c0_0] : memref<1x128x8xf32, #tpu.memory_space<vmem>>, vector<1x128x8xf32>
    %2 = vector.shape_cast %1 : vector<1x128x8xf32> to vector<128x8xf32>
    %c0_1 = arith.constant 0 : index
    %c0_2 = arith.constant 0 : index
    %c0_3 = arith.constant 0 : index
    %3 = vector.load %arg2[%c0_1, %c0_2, %c0_3] : memref<4x16x8xf32, #tpu.memory_space<vmem>>, vector<1x16x8xf32>
    %4 = vector.shape_cast %3 : vector<1x16x8xf32> to vector<16x8xf32>
    %c0_4 = arith.constant 0 : index
    %c0_5 = arith.constant 0 : index
    %c0_6 = arith.constant 0 : index
    %5 = vector.load %arg3[%c0_4, %c0_5, %c0_6] : memref<4x8x8xf32, #tpu.memory_space<vmem>>, vector<1x8x8xf32>
    %6 = vector.shape_cast %5 : vector<1x8x8xf32> to vector<8x8xf32>
    %c0_7 = arith.constant 0 : index
    %c0_8 = arith.constant 0 : index
    %c0_9 = arith.constant 0 : index
    %7 = vector.load %arg4[%c0_7, %c0_8, %c0_9] : memref<4x8x1xf32, #tpu.memory_space<vmem>>, vector<1x8x1xf32>
    %8 = vector.shape_cast %7 : vector<1x8x1xf32> to vector<8x1xf32>
    %cst = arith.constant dense<0.000000e+00> : vector<16x128xf32>
    %9 = tpu.matmul %4, %2, %cst {dimension_numbers = #tpu.dot_dimension_numbers<[1], [1], [0], [0], [0, 0, 1, 0], [], []>} : vector<16x8xf32>, vector<128x8xf32>, vector<16x128xf32> -> vector<16x128xf32>
    %10 = vector.extract_strided_slice %9 {offsets = [0, 0], sizes = [8, 128], strides = [1, 1]} : vector<16x128xf32> to vector<8x128xf32>
    %11 = vector.broadcast %8 : vector<8x1xf32> to vector<8x128xf32>
    %12 = arith.addf %10, %11 : vector<8x128xf32>
    %13 = math.tanh %12 : vector<8x128xf32>
    %14 = vector.extract_strided_slice %9 {offsets = [8, 0], sizes = [8, 128], strides = [1, 1]} : vector<16x128xf32> to vector<8x128xf32>
    %cst_10 = arith.constant dense<0.000000e+00> : vector<8x128xf32>
    %15 = tpu.matmul %6, %13, %cst_10 {dimension_numbers = #tpu.dot_dimension_numbers<[1], [0], [0], [1], [0, 0, 1, 1], [], []>} : vector<8x8xf32>, vector<8x128xf32>, vector<8x128xf32> -> vector<8x128xf32>
    %16 = arith.addf %14, %15 : vector<8x128xf32>
    %c1 = arith.constant 1 : index
    %c0_11 = arith.constant 0 : index
    %c0_12 = arith.constant 0 : index
    %17 = vector.load %arg2[%c1, %c0_11, %c0_12] : memref<4x16x8xf32, #tpu.memory_space<vmem>>, vector<1x16x8xf32>
    %18 = vector.shape_cast %17 : vector<1x16x8xf32> to vector<16x8xf32>
    %c1_13 = arith.constant 1 : index
    %c0_14 = arith.constant 0 : index
    %c0_15 = arith.constant 0 : index
    %19 = vector.load %arg3[%c1_13, %c0_14, %c0_15] : memref<4x8x8xf32, #tpu.memory_space<vmem>>, vector<1x8x8xf32>
    %20 = vector.shape_cast %19 : vector<1x8x8xf32> to vector<8x8xf32>
    %c1_16 = arith.constant 1 : index
    %c0_17 = arith.constant 0 : index
    %c0_18 = arith.constant 0 : index
    %21 = vector.load %arg4[%c1_16, %c0_17, %c0_18] : memref<4x8x1xf32, #tpu.memory_space<vmem>>, vector<1x8x1xf32>
    %22 = vector.shape_cast %21 : vector<1x8x1xf32> to vector<8x1xf32>
    %cst_19 = arith.constant dense<0.000000e+00> : vector<16x128xf32>
    %23 = tpu.matmul %18, %16, %cst_19 {dimension_numbers = #tpu.dot_dimension_numbers<[1], [0], [0], [1], [0, 0, 1, 1], [], []>} : vector<16x8xf32>, vector<8x128xf32>, vector<16x128xf32> -> vector<16x128xf32>
    %24 = vector.extract_strided_slice %23 {offsets = [0, 0], sizes = [8, 128], strides = [1, 1]} : vector<16x128xf32> to vector<8x128xf32>
    %25 = vector.broadcast %22 : vector<8x1xf32> to vector<8x128xf32>
    %26 = arith.addf %24, %25 : vector<8x128xf32>
    %27 = math.tanh %26 : vector<8x128xf32>
    %28 = vector.extract_strided_slice %23 {offsets = [8, 0], sizes = [8, 128], strides = [1, 1]} : vector<16x128xf32> to vector<8x128xf32>
    %cst_20 = arith.constant dense<0.000000e+00> : vector<8x128xf32>
    %29 = tpu.matmul %20, %27, %cst_20 {dimension_numbers = #tpu.dot_dimension_numbers<[1], [0], [0], [1], [0, 0, 1, 1], [], []>} : vector<8x8xf32>, vector<8x128xf32>, vector<8x128xf32> -> vector<8x128xf32>
    %30 = arith.addf %28, %29 : vector<8x128xf32>
    %c2 = arith.constant 2 : index
    %c0_21 = arith.constant 0 : index
    %c0_22 = arith.constant 0 : index
    %31 = vector.load %arg2[%c2, %c0_21, %c0_22] : memref<4x16x8xf32, #tpu.memory_space<vmem>>, vector<1x16x8xf32>
    %32 = vector.shape_cast %31 : vector<1x16x8xf32> to vector<16x8xf32>
    %c2_23 = arith.constant 2 : index
    %c0_24 = arith.constant 0 : index
    %c0_25 = arith.constant 0 : index
    %33 = vector.load %arg3[%c2_23, %c0_24, %c0_25] : memref<4x8x8xf32, #tpu.memory_space<vmem>>, vector<1x8x8xf32>
    %34 = vector.shape_cast %33 : vector<1x8x8xf32> to vector<8x8xf32>
    %c2_26 = arith.constant 2 : index
    %c0_27 = arith.constant 0 : index
    %c0_28 = arith.constant 0 : index
    %35 = vector.load %arg4[%c2_26, %c0_27, %c0_28] : memref<4x8x1xf32, #tpu.memory_space<vmem>>, vector<1x8x1xf32>
    %36 = vector.shape_cast %35 : vector<1x8x1xf32> to vector<8x1xf32>
    %cst_29 = arith.constant dense<0.000000e+00> : vector<16x128xf32>
    %37 = tpu.matmul %32, %30, %cst_29 {dimension_numbers = #tpu.dot_dimension_numbers<[1], [0], [0], [1], [0, 0, 1, 1], [], []>} : vector<16x8xf32>, vector<8x128xf32>, vector<16x128xf32> -> vector<16x128xf32>
    %38 = vector.extract_strided_slice %37 {offsets = [0, 0], sizes = [8, 128], strides = [1, 1]} : vector<16x128xf32> to vector<8x128xf32>
    %39 = vector.broadcast %36 : vector<8x1xf32> to vector<8x128xf32>
    %40 = arith.addf %38, %39 : vector<8x128xf32>
    %41 = math.tanh %40 : vector<8x128xf32>
    %42 = vector.extract_strided_slice %37 {offsets = [8, 0], sizes = [8, 128], strides = [1, 1]} : vector<16x128xf32> to vector<8x128xf32>
    %cst_30 = arith.constant dense<0.000000e+00> : vector<8x128xf32>
    %43 = tpu.matmul %34, %41, %cst_30 {dimension_numbers = #tpu.dot_dimension_numbers<[1], [0], [0], [1], [0, 0, 1, 1], [], []>} : vector<8x8xf32>, vector<8x128xf32>, vector<8x128xf32> -> vector<8x128xf32>
    %44 = arith.addf %42, %43 : vector<8x128xf32>
    %c3 = arith.constant 3 : index
    %c0_31 = arith.constant 0 : index
    %c0_32 = arith.constant 0 : index
    %45 = vector.load %arg2[%c3, %c0_31, %c0_32] : memref<4x16x8xf32, #tpu.memory_space<vmem>>, vector<1x16x8xf32>
    %46 = vector.shape_cast %45 : vector<1x16x8xf32> to vector<16x8xf32>
    %c3_33 = arith.constant 3 : index
    %c0_34 = arith.constant 0 : index
    %c0_35 = arith.constant 0 : index
    %47 = vector.load %arg3[%c3_33, %c0_34, %c0_35] : memref<4x8x8xf32, #tpu.memory_space<vmem>>, vector<1x8x8xf32>
    %48 = vector.shape_cast %47 : vector<1x8x8xf32> to vector<8x8xf32>
    %c3_36 = arith.constant 3 : index
    %c0_37 = arith.constant 0 : index
    %c0_38 = arith.constant 0 : index
    %49 = vector.load %arg4[%c3_36, %c0_37, %c0_38] : memref<4x8x1xf32, #tpu.memory_space<vmem>>, vector<1x8x1xf32>
    %50 = vector.shape_cast %49 : vector<1x8x1xf32> to vector<8x1xf32>
    %cst_39 = arith.constant dense<0.000000e+00> : vector<16x128xf32>
    %51 = tpu.matmul %46, %44, %cst_39 {dimension_numbers = #tpu.dot_dimension_numbers<[1], [0], [0], [1], [0, 0, 1, 1], [], []>} : vector<16x8xf32>, vector<8x128xf32>, vector<16x128xf32> -> vector<16x128xf32>
    %52 = vector.extract_strided_slice %51 {offsets = [0, 0], sizes = [8, 128], strides = [1, 1]} : vector<16x128xf32> to vector<8x128xf32>
    %53 = vector.broadcast %50 : vector<8x1xf32> to vector<8x128xf32>
    %54 = arith.addf %52, %53 : vector<8x128xf32>
    %55 = math.tanh %54 : vector<8x128xf32>
    %56 = vector.extract_strided_slice %51 {offsets = [8, 0], sizes = [8, 128], strides = [1, 1]} : vector<16x128xf32> to vector<8x128xf32>
    %cst_40 = arith.constant dense<0.000000e+00> : vector<8x128xf32>
    %57 = tpu.matmul %48, %55, %cst_40 {dimension_numbers = #tpu.dot_dimension_numbers<[1], [0], [0], [1], [0, 0, 1, 1], [], []>} : vector<8x8xf32>, vector<8x128xf32>, vector<8x128xf32> -> vector<8x128xf32>
    %58 = arith.addf %56, %57 : vector<8x128xf32>
    %59 = arith.index_cast %c0_i32 : i32 to index
    %c0_41 = arith.constant 0 : index
    %c0_42 = arith.constant 0 : index
    %60 = vector.load %arg5[%59, %c0_41, %c0_42] : memref<1x8x128xf32, #tpu.memory_space<vmem>>, vector<1x8x128xf32>
    %61 = vector.shape_cast %60 : vector<1x8x128xf32> to vector<8x128xf32>
    %62 = vector.shape_cast %58 : vector<8x128xf32> to vector<1x8x128xf32>
    tpu.vector_store %arg5[%59, %c0_41, %c0_42], %62 {strides = array<i32>} : memref<1x8x128xf32, #tpu.memory_space<vmem>>, vector<1x8x128xf32>,
    %c1_i32 = arith.constant 1 : i32
    return
  }
  func.func @transform_0(%arg0: i32) -> (i32, i32, i32) {
    %c0_i32 = arith.constant 0 : i32
    %c0_i32_0 = arith.constant 0 : i32
    %c0_i32_1 = arith.constant 0 : i32
    return %arg0, %c0_i32, %c0_i32_0 : i32, i32, i32
  }
  func.func @transform_1(%arg0: i32) -> (i32, i32, i32) {
    %c0_i32 = arith.constant 0 : i32
    %c0_i32_0 = arith.constant 0 : i32
    %c0_i32_1 = arith.constant 0 : i32
    %c0_i32_2 = arith.constant 0 : i32
    return %c0_i32, %c0_i32_0, %c0_i32_1 : i32, i32, i32
  }
  func.func @transform_2(%arg0: i32) -> (i32, i32, i32) {
    %c0_i32 = arith.constant 0 : i32
    %c0_i32_0 = arith.constant 0 : i32
    %c0_i32_1 = arith.constant 0 : i32
    %c0_i32_2 = arith.constant 0 : i32
    return %c0_i32, %c0_i32_0, %c0_i32_1 : i32, i32, i32
  }
  func.func @transform_3(%arg0: i32) -> (i32, i32, i32) {
    %c0_i32 = arith.constant 0 : i32
    %c0_i32_0 = arith.constant 0 : i32
    %c0_i32_1 = arith.constant 0 : i32
    %c0_i32_2 = arith.constant 0 : i32
    return %c0_i32, %c0_i32_0, %c0_i32_1 : i32, i32, i32
  }
  func.func @transform_4(%arg0: i32) -> (i32, i32, i32) {
    %c0_i32 = arith.constant 0 : i32
    %c0_i32_0 = arith.constant 0 : i32
    %c0_i32_1 = arith.constant 0 : i32
    return %arg0, %c0_i32, %c0_i32_0 : i32, i32, i32
  }
}

</mosaic_0001>

<llo_original>
// kernel: h1_forward.1
$region0: #{h1_forward.1}
  #allocation0 [shape = 'u32[]', space=smem, size = 0x4, offset = 0x4, fixed_abs, tag = 'smem constant byte address 0x4 - core index']
  #allocation1 [shape = 'u32[144,128]{1,0:T(1,128)}', space=vmem, size = 0x12000, scoped, tag = 'internal scratch']
  %s0 = inlined_call_operand.vmem [shape: f32[1,128,8], index: 0, kind: input, shape index: {}]
  %s1 = inlined_call_operand.vmem [shape: f32[4,16,8], index: 1, kind: input, shape index: {}]
  %s2 = inlined_call_operand.vmem [shape: f32[4,8,8], index: 2, kind: input, shape index: {}]
  %s3 = inlined_call_operand.vmem [shape: f32[4,8,1], index: 3, kind: input, shape index: {}]
  %s4 = inlined_call_operand.vmem [shape: f32[1,8,128], index: 4, kind: output, shape index: {}]
  %s5 = sld [smem:[#allocation0]]
  $region26: #{h1_forward.1} parent=0
    _
  %s7 = ssub.s32 1, %s5
  %s8 = scalar_select 0, %s7, %s5
  // Predicated region
  $region2: #{h1_forward.1} parent=0 // pred_check
    _
  $region3: #{h1_forward.1} parent=0 // pred_check_branch
    %10 = sbr.rel (0) target = $region5
  $region4: #{h1_forward.1} parent=0 // pred_region
    _
  $region5: #{h1_forward.1} parent=0 // pred_fallthru
    _
  // Predicated region
  $region6: #{h1_forward.1} parent=0 // pred_check
    _
  $region7: #{h1_forward.1} parent=0 // pred_check_branch
    %12 = sbr.rel (0) target = $region9
  $region8: #{h1_forward.1} parent=0 // pred_region
    _
  $region9: #{h1_forward.1} parent=0 // pred_fallthru
    _
  // Predicated region
  $region10: #{h1_forward.1} parent=0 // pred_check
    _
  $region11: #{h1_forward.1} parent=0 // pred_check_branch
    %14 = sbr.rel (0) target = $region13
  $region12: #{h1_forward.1} parent=0 // pred_region
    _
  $region13: #{h1_forward.1} parent=0 // pred_fallthru
    _
  // Predicated region
  $region14: #{h1_forward.1} parent=0 // pred_check
    _
  $region15: #{h1_forward.1} parent=0 // pred_check_branch
    %16 = sbr.rel (0) target = $region17
  $region16: #{h1_forward.1} parent=0 // pred_region
    _
  $region17: #{h1_forward.1} parent=0 // pred_fallthru
    _
  %v17 = vld [vmem:[%s0] sm:$0xff]
  %v18 = vld [vmem:[%s0 + $0x8] sm:$0xff]
  %v19 = vld [vmem:[%s0 + $0x10] sm:$0xff]
  %v20 = vld [vmem:[%s0 + $0x18] sm:$0xff]
  %v21 = vld [vmem:[%s0 + $0x20] sm:$0xff]
  %v22 = vld [vmem:[%s0 + $0x28] sm:$0xff]
  %v23 = vld [vmem:[%s0 + $0x30] sm:$0xff]
  %v24 = vld [vmem:[%s0 + $0x38] sm:$0xff]
  %v25 = vld [vmem:[%s0 + $0x40] sm:$0xff]
  %v26 = vld [vmem:[%s0 + $0x48] sm:$0xff]
  %v27 = vld [vmem:[%s0 + $0x50] sm:$0xff]
  %v28 = vld [vmem:[%s0 + $0x58] sm:$0xff]
  %v29 = vld [vmem:[%s0 + $0x60] sm:$0xff]
  %v30 = vld [vmem:[%s0 + $0x68] sm:$0xff]
  %v31 = vld [vmem:[%s0 + $0x70] sm:$0xff]
  %v32 = vld [vmem:[%s0 + $0x78] sm:$0xff]
  %v33 = vld [vmem:[%s1] sm:$0xff]
  %v34 = vld [vmem:[%s1 + $0x8] sm:$0xff]
  %v35 = vld [vmem:[%s2] sm:$0xff]
  %v36 = vld [vmem:[%s3] sm:$0xff]
  %vm37 = vcmask 64512
  %v39 = vsel %vm37, %v33, 0
  %v42 = vsel %vm37, %v34, 0
  %v45 = vsel %vm37, %v17, 0
  %v48 = vsel %vm37, %v18, 0
  %v51 = vsel %vm37, %v19, 0
  %v54 = vsel %vm37, %v20, 0
  %v57 = vsel %vm37, %v21, 0
  %v60 = vsel %vm37, %v22, 0
  %v63 = vsel %vm37, %v23, 0
  %v66 = vsel %vm37, %v24, 0
  %v69 = vsel %vm37, %v25, 0
  %v72 = vsel %vm37, %v26, 0
  %v75 = vsel %vm37, %v27, 0
  %v78 = vsel %vm37, %v28, 0
  %v81 = vsel %vm37, %v29, 0
  %v84 = vsel %vm37, %v30, 0
  %v87 = vsel %vm37, %v31, 0
  %v90 = vsel %vm37, %v32, 0
  %92 = vmatprep.subr.mxu0 0.0
  %93 = vmatpush1.xpose.msra.mxu0 %v45
  %94 = vmatprep.subr.mxu0 0.0
  %95 = vmatpush1.xpose.msra.mxu0 %v48
  %96 = vmatprep.subr.mxu0 0.0
  %97 = vmatpush1.xpose.msra.mxu0 %v51
  %98 = vmatprep.subr.mxu0 0.0
  %99 = vmatpush1.xpose.msra.mxu0 %v54
  %100 = vmatprep.subr.mxu0 0.0
  %101 = vmatpush1.xpose.msra.mxu0 %v57
  %102 = vmatprep.subr.mxu0 0.0
  %103 = vmatpush1.xpose.msra.mxu0 %v60
  %104 = vmatprep.subr.mxu0 0.0
  %105 = vmatpush1.xpose.msra.mxu0 %v63
  %106 = vmatprep.subr.mxu0 0.0
  %107 = vmatpush1.xpose.msra.mxu0 %v66
  %108 = vmatprep.subr.mxu0 0.0
  %109 = vmatpush1.xpose.msra.mxu0 %v69
  %110 = vmatprep.subr.mxu0 0.0
  %111 = vmatpush1.xpose.msra.mxu0 %v72
  %112 = vmatprep.subr.mxu0 0.0
  %113 = vmatpush1.xpose.msra.mxu0 %v75
  %114 = vmatprep.subr.mxu0 0.0
  %115 = vmatpush1.xpose.msra.mxu0 %v78
  %116 = vmatprep.subr.mxu0 0.0
  %117 = vmatpush1.xpose.msra.mxu0 %v81
  %118 = vmatprep.subr.mxu0 0.0
  %119 = vmatpush1.xpose.msra.mxu0 %v84
  %120 = vmatprep.subr.mxu0 0.0
  %121 = vmatpush1.xpose.msra.mxu0 %v87
  %122 = vmatprep.subr.mxu0 0.0
  %123 = vmatpush1.xpose.msra.mxu0 %v90
  %124 = vmatprep.subr.mxu0 0.0
  %125 = vmatpush1.xpose.msra.mxu0 0.0
  %126 = vmatprep.subr.mxu0 0.0
  %127 = vmatpush1.xpose.msra.mxu0 0.0
  %128 = vmatprep.subr.mxu0 0.0
  %129 = vmatpush1.xpose.msra.mxu0 0.0
  %130 = vmatprep.subr.mxu0 0.0
  %131 = vmatpush1.xpose.msra.mxu0 0.0
  %132 = vmatprep.subr.mxu0 0.0
  %133 = vmatpush1.xpose.msra.mxu0 0.0
  %134 = vmatprep.subr.mxu0 0.0
  %135 = vmatpush1.xpose.msra.mxu0 0.0
  %136 = vmatprep.subr.mxu0 0.0
  %137 = vmatpush1.xpose.msra.mxu0 0.0
  %138 = vmatprep.subr.mxu0 0.0
  %139 = vmatpush1.xpose.msra.mxu0 0.0
  %140 = vmatprep.subr.mxu0 0.0
  %141 = vmatpush1.xpose.msra.mxu0 0.0
  %142 = vmatprep.subr.mxu0 0.0
  %143 = vmatpush1.xpose.msra.mxu0 0.0
  %144 = vmatprep.subr.mxu0 0.0
  %145 = vmatpush1.xpose.msra.mxu0 0.0
  %146 = vmatprep.subr.mxu0 0.0
  %147 = vmatpush1.xpose.msra.mxu0 0.0
  %148 = vmatprep.subr.mxu0 0.0
  %149 = vmatpush1.xpose.msra.mxu0 0.0
  %150 = vmatprep.subr.mxu0 0.0
  %151 = vmatpush1.xpose.msra.mxu0 0.0
  %152 = vmatprep.subr.mxu0 0.0
  %153 = vmatpush1.xpose.msra.mxu0 0.0
  %154 = vmatprep.subr.mxu0 0.0
  %155 = vmatpush1.xpose.msra.mxu0 0.0
  %156 = vmatprep.mubr.f32.mxu0 0.0
  %157 = vmatmul.mubr.f32.gmra.mrb[0].mxu0 %v39
  %v158 = vpop.f32.mrb[0].mxu0
  %v159 = vadd.f32 0.0, %v158
  %v160 = vpop.f32.mrb[0].mxu0
  %161 = vmatprep.mubr.f32.mxu0 0.0
  %162 = vmatmul.mubr.f32.gmra.mrb[0].mxu0 %v42
  %v163 = vpop.f32.mrb[0].mxu0
  %v164 = vadd.f32 0.0, %v163
  %v165 = vpop.f32.mrb[0].mxu0
  %166 = vdwg.mxu0
  %168 = vset.pattern.permute.xlu0 0
  %169 = vperm.xlu0 %168, %v36
  %v170 = vpop.permute.xlu0 %169
  %v172 = vadd.f32 %v159, %v170
  %v173 = vtanh.pop %v172
  %v175 = vsel %vm37, %v35, 0
  %177 = vmatprep.subr.mxu0 0.0
  %178 = vmatpush1.msra.mxu0 %v173
  %179 = vmatprep.subr.mxu0 0.0
  %180 = vmatpush1.msra.mxu0 0.0
  %181 = vmatprep.subr.mxu0 0.0
  %182 = vmatpush1.msra.mxu0 0.0
  %183 = vmatprep.subr.mxu0 0.0
  %184 = vmatpush1.msra.mxu0 0.0
  %185 = vmatprep.subr.mxu0 0.0
  %186 = vmatpush1.msra.mxu0 0.0
  %187 = vmatprep.subr.mxu0 0.0
  %188 = vmatpush1.msra.mxu0 0.0
  %189 = vmatprep.subr.mxu0 0.0
  %190 = vmatpush1.msra.mxu0 0.0
  %191 = vmatprep.subr.mxu0 0.0
  %192 = vmatpush1.msra.mxu0 0.0
  %193 = vmatprep.subr.mxu0 0.0
  %194 = vmatpush1.msra.mxu0 0.0
  %195 = vmatprep.subr.mxu0 0.0
  %196 = vmatpush1.msra.mxu0 0.0
  %197 = vmatprep.subr.mxu0 0.0
  %198 = vmatpush1.msra.mxu0 0.0
  %199 = vmatprep.subr.mxu0 0.0
  %200 = vmatpush1.msra.mxu0 0.0
  %201 = vmatprep.subr.mxu0 0.0
  %202 = vmatpush1.msra.mxu0 0.0
  %203 = vmatprep.subr.mxu0 0.0
  %204 = vmatpush1.msra.mxu0 0.0
  %205 = vmatprep.subr.mxu0 0.0
  %206 = vmatpush1.msra.mxu0 0.0
  %207 = vmatprep.subr.mxu0 0.0
  %208 = vmatpush1.msra.mxu0 0.0
  %209 = vmatprep.subr.mxu0 0.0
  %210 = vmatpush1.msra.mxu0 0.0
  %211 = vmatprep.subr.mxu0 0.0
  %212 = vmatpush1.msra.mxu0 0.0
  %213 = vmatprep.subr.mxu0 0.0
  %214 = vmatpush1.msra.mxu0 0.0
  %215 = vmatprep.subr.mxu0 0.0
  %216 = vmatpush1.msra.mxu0 0.0
  %217 = vmatprep.subr.mxu0 0.0
  %218 = vmatpush1.msra.mxu0 0.0
  %219 = vmatprep.subr.mxu0 0.0
  %220 = vmatpush1.msra.mxu0 0.0
  %221 = vmatprep.subr.mxu0 0.0
  %222 = vmatpush1.msra.mxu0 0.0
  %223 = vmatprep.subr.mxu0 0.0
  %224 = vmatpush1.msra.mxu0 0.0
  %225 = vmatprep.subr.mxu0 0.0
  %226 = vmatpush1.msra.mxu0 0.0
  %227 = vmatprep.subr.mxu0 0.0
  %228 = vmatpush1.msra.mxu0 0.0
  %229 = vmatprep.subr.mxu0 0.0
  %230 = vmatpush1.msra.mxu0 0.0
  %231 = vmatprep.subr.mxu0 0.0
  %232 = vmatpush1.msra.mxu0 0.0
  %233 = vmatprep.subr.mxu0 0.0
  %234 = vmatpush1.msra.mxu0 0.0
  %235 = vmatprep.subr.mxu0 0.0
  %236 = vmatpush1.msra.mxu0 0.0
  %237 = vmatprep.subr.mxu0 0.0
  %238 = vmatpush1.msra.mxu0 0.0
  %239 = vmatprep.subr.mxu0 0.0
  %240 = vmatpush1.msra.mxu0 0.0
  %241 = vmatprep.mubr.f32.mxu0 0.0
  %242 = vmatmul.mubr.f32.gmra.mrb[0].mxu0 %v175
  %v243 = vpop.f32.mrb[0].mxu0
  %v244 = vadd.f32 0.0, %v243
  %v245 = vpop.f32.mrb[0].mxu0
  %246 = vdwg.mxu0
  %v247 = vadd.f32 %v164, %v244
  %s248 = scalar_lea.vmem %s1, 16
  %v249 = vld [vmem:[%s248] sm:$0xff]
  %v250 = vld [vmem:[%s248 + $0x8] sm:$0xff]
  %s251 = scalar_lea.vmem %s2, 8
  %v252 = vld [vmem:[%s251] sm:$0xff]
  %s253 = scalar_lea.vmem %s3, 8
  %v254 = vld [vmem:[%s253] sm:$0xff]
  %v256 = vsel %vm37, %v249, 0
  %v259 = vsel %vm37, %v250, 0
  %261 = vmatprep.subr.mxu0 0.0
  %262 = vmatpush1.msra.mxu0 %v247
  %263 = vmatprep.subr.mxu0 0.0
  %264 = vmatpush1.msra.mxu0 0.0
  %265 = vmatprep.subr.mxu0 0.0
  %266 = vmatpush1.msra.mxu0 0.0
  %267 = vmatprep.subr.mxu0 0.0
  %268 = vmatpush1.msra.mxu0 0.0
  %269 = vmatprep.subr.mxu0 0.0
  %270 = vmatpush1.msra.mxu0 0.0
  %271 = vmatprep.subr.mxu0 0.0
  %272 = vmatpush1.msra.mxu0 0.0
  %273 = vmatprep.subr.mxu0 0.0
  %274 = vmatpush1.msra.mxu0 0.0
  %275 = vmatprep.subr.mxu0 0.0
  %276 = vmatpush1.msra.mxu0 0.0
  %277 = vmatprep.subr.mxu0 0.0
  %278 = vmatpush1.msra.mxu0 0.0
  %279 = vmatprep.subr.mxu0 0.0
  %280 = vmatpush1.msra.mxu0 0.0
  %281 = vmatprep.subr.mxu0 0.0
  %282 = vmatpush1.msra.mxu0 0.0
  %283 = vmatprep.subr.mxu0 0.0
  %284 = vmatpush1.msra.mxu0 0.0
  %285 = vmatprep.subr.mxu0 0.0
  %286 = vmatpush1.msra.mxu0 0.0
  %287 = vmatprep.subr.mxu0 0.0
  %288 = vmatpush1.msra.mxu0 0.0
  %289 = vmatprep.subr.mxu0 0.0
  %290 = vmatpush1.msra.mxu0 0.0
  %291 = vmatprep.subr.mxu0 0.0
  %292 = vmatpush1.msra.mxu0 0.0
  %293 = vmatprep.subr.mxu0 0.0
  %294 = vmatpush1.msra.mxu0 0.0
  %295 = vmatprep.subr.mxu0 0.0
  %296 = vmatpush1.msra.mxu0 0.0
  %297 = vmatprep.subr.mxu0 0.0
  %298 = vmatpush1.msra.mxu0 0.0
  %299 = vmatprep.subr.mxu0 0.0
  %300 = vmatpush1.msra.mxu0 0.0
  %301 = vmatprep.subr.mxu0 0.0
  %302 = vmatpush1.msra.mxu0 0.0
  %303 = vmatprep.subr.mxu0 0.0
  %304 = vmatpush1.msra.mxu0 0.0
  %305 = vmatprep.subr.mxu0 0.0
  %306 = vmatpush1.msra.mxu0 0.0
  %307 = vmatprep.subr.mxu0 0.0
  %308 = vmatpush1.msra.mxu0 0.0
  %309 = vmatprep.subr.mxu0 0.0
  %310 = vmatpush1.msra.mxu0 0.0
  %311 = vmatprep.subr.mxu0 0.0
  %312 = vmatpush1.msra.mxu0 0.0
  %313 = vmatprep.subr.mxu0 0.0
  %314 = vmatpush1.msra.mxu0 0.0
  %315 = vmatprep.subr.mxu0 0.0
  %316 = vmatpush1.msra.mxu0 0.0
  %317 = vmatprep.subr.mxu0 0.0
  %318 = vmatpush1.msra.mxu0 0.0
  %319 = vmatprep.subr.mxu0 0.0
  %320 = vmatpush1.msra.mxu0 0.0
  %321 = vmatprep.subr.mxu0 0.0
  %322 = vmatpush1.msra.mxu0 0.0
  %323 = vmatprep.subr.mxu0 0.0
  %324 = vmatpush1.msra.mxu0 0.0
  %325 = vmatprep.mubr.f32.mxu0 0.0
  %326 = vmatmul.mubr.f32.gmra.mrb[0].mxu0 %v256
  %v327 = vpop.f32.mrb[0].mxu0
  %v328 = vadd.f32 0.0, %v327
  %v329 = vpop.f32.mrb[0].mxu0
  %330 = vmatprep.mubr.f32.mxu0 0.0
  %331 = vmatmul.mubr.f32.gmra.mrb[0].mxu0 %v259
  %v332 = vpop.f32.mrb[0].mxu0
  %v333 = vadd.f32 0.0, %v332
  %v334 = vpop.f32.mrb[0].mxu0
  %335 = vdwg.mxu0
  %337 = vset.pattern.permute.xlu0 0
  %338 = vperm.xlu0 %337, %v254
  %v339 = vpop.permute.xlu0 %338
  %v341 = vadd.f32 %v328, %v339
  %v342 = vtanh.pop %v341
  %v344 = vsel %vm37, %v252, 0
  %346 = vmatprep.subr.mxu0 0.0
  %347 = vmatpush1.msra.mxu0 %v342
  %348 = vmatprep.subr.mxu0 0.0
  %349 = vmatpush1.msra.mxu0 0.0
  %350 = vmatprep.subr.mxu0 0.0
  %351 = vmatpush1.msra.mxu0 0.0
  %352 = vmatprep.subr.mxu0 0.0
  %353 = vmatpush1.msra.mxu0 0.0
  %354 = vmatprep.subr.mxu0 0.0
  %355 = vmatpush1.msra.mxu0 0.0
  %356 = vmatprep.subr.mxu0 0.0
  %357 = vmatpush1.msra.mxu0 0.0
  %358 = vmatprep.subr.mxu0 0.0
  %359 = vmatpush1.msra.mxu0 0.0
  %360 = vmatprep.subr.mxu0 0.0
  %361 = vmatpush1.msra.mxu0 0.0
  %362 = vmatprep.subr.mxu0 0.0
  %363 = vmatpush1.msra.mxu0 0.0
  %364 = vmatprep.subr.mxu0 0.0
  %365 = vmatpush1.msra.mxu0 0.0
  %366 = vmatprep.subr.mxu0 0.0
  %367 = vmatpush1.msra.mxu0 0.0
  %368 = vmatprep.subr.mxu0 0.0
  %369 = vmatpush1.msra.mxu0 0.0
  %370 = vmatprep.subr.mxu0 0.0
  %371 = vmatpush1.msra.mxu0 0.0
  %372 = vmatprep.subr.mxu0 0.0
  %373 = vmatpush1.msra.mxu0 0.0
  %374 = vmatprep.subr.mxu0 0.0
  %375 = vmatpush1.msra.mxu0 0.0
  %376 = vmatprep.subr.mxu0 0.0
  %377 = vmatpush1.msra.mxu0 0.0
  %378 = vmatprep.subr.mxu0 0.0
  %379 = vmatpush1.msra.mxu0 0.0
  %380 = vmatprep.subr.mxu0 0.0
  %381 = vmatpush1.msra.mxu0 0.0
  %382 = vmatprep.subr.mxu0 0.0
  %383 = vmatpush1.msra.mxu0 0.0
  %384 = vmatprep.subr.mxu0 0.0
  %385 = vmatpush1.msra.mxu0 0.0
  %386 = vmatprep.subr.mxu0 0.0
  %387 = vmatpush1.msra.mxu0 0.0
  %388 = vmatprep.subr.mxu0 0.0
  %389 = vmatpush1.msra.mxu0 0.0
  %390 = vmatprep.subr.mxu0 0.0
  %391 = vmatpush1.msra.mxu0 0.0
  %392 = vmatprep.subr.mxu0 0.0
  %393 = vmatpush1.msra.mxu0 0.0
  %394 = vmatprep.subr.mxu0 0.0
  %395 = vmatpush1.msra.mxu0 0.0
  %396 = vmatprep.subr.mxu0 0.0
  %397 = vmatpush1.msra.mxu0 0.0
  %398 = vmatprep.subr.mxu0 0.0
  %399 = vmatpush1.msra.mxu0 0.0
  %400 = vmatprep.subr.mxu0 0.0
  %401 = vmatpush1.msra.mxu0 0.0
  %402 = vmatprep.subr.mxu0 0.0
  %403 = vmatpush1.msra.mxu0 0.0
  %404 = vmatprep.subr.mxu0 0.0
  %405 = vmatpush1.msra.mxu0 0.0
  %406 = vmatprep.subr.mxu0 0.0
  %407 = vmatpush1.msra.mxu0 0.0
  %408 = vmatprep.subr.mxu0 0.0
  %409 = vmatpush1.msra.mxu0 0.0
  %410 = vmatprep.mubr.f32.mxu0 0.0
  %411 = vmatmul.mubr.f32.gmra.mrb[0].mxu0 %v344
  %v412 = vpop.f32.mrb[0].mxu0
  %v413 = vadd.f32 0.0, %v412
  %v414 = vpop.f32.mrb[0].mxu0
  %415 = vdwg.mxu0
  %v416 = vadd.f32 %v333, %v413
  %s417 = scalar_lea.vmem %s1, 32
  %v418 = vld [vmem:[%s417] sm:$0xff]
  %v419 = vld [vmem:[%s417 + $0x8] sm:$0xff]
  %s420 = scalar_lea.vmem %s2, 16
  %v421 = vld [vmem:[%s420] sm:$0xff]
  %s422 = scalar_lea.vmem %s3, 16
  %v423 = vld [vmem:[%s422] sm:$0xff]
  %v425 = vsel %vm37, %v418, 0
  %v428 = vsel %vm37, %v419, 0
  %430 = vmatprep.subr.mxu0 0.0
  %431 = vmatpush1.msra.mxu0 %v416
  %432 = vmatprep.subr.mxu0 0.0
  %433 = vmatpush1.msra.mxu0 0.0
  %434 = vmatprep.subr.mxu0 0.0
  %435 = vmatpush1.msra.mxu0 0.0
  %436 = vmatprep.subr.mxu0 0.0
  %437 = vmatpush1.msra.mxu0 0.0
  %438 = vmatprep.subr.mxu0 0.0
  %439 = vmatpush1.msra.mxu0 0.0
  %440 = vmatprep.subr.mxu0 0.0
  %441 = vmatpush1.msra.mxu0 0.0
  %442 = vmatprep.subr.mxu0 0.0
  %443 = vmatpush1.msra.mxu0 0.0
  %444 = vmatprep.subr.mxu0 0.0
  %445 = vmatpush1.msra.mxu0 0.0
  %446 = vmatprep.subr.mxu0 0.0
  %447 = vmatpush1.msra.mxu0 0.0
  %448 = vmatprep.subr.mxu0 0.0
  %449 = vmatpush1.msra.mxu0 0.0
  %450 = vmatprep.subr.mxu0 0.0
  %451 = vmatpush1.msra.mxu0 0.0
  %452 = vmatprep.subr.mxu0 0.0
  %453 = vmatpush1.msra.mxu0 0.0
  %454 = vmatprep.subr.mxu0 0.0
  %455 = vmatpush1.msra.mxu0 0.0
  %456 = vmatprep.subr.mxu0 0.0
  %457 = vmatpush1.msra.mxu0 0.0
  %458 = vmatprep.subr.mxu0 0.0
  %459 = vmatpush1.msra.mxu0 0.0
  %460 = vmatprep.subr.mxu0 0.0
  %461 = vmatpush1.msra.mxu0 0.0
  %462 = vmatprep.subr.mxu0 0.0
  %463 = vmatpush1.msra.mxu0 0.0
  %464 = vmatprep.subr.mxu0 0.0
  %465 = vmatpush1.msra.mxu0 0.0
  %466 = vmatprep.subr.mxu0 0.0
  %467 = vmatpush1.msra.mxu0 0.0
  %468 = vmatprep.subr.mxu0 0.0
  %469 = vmatpush1.msra.mxu0 0.0
  %470 = vmatprep.subr.mxu0 0.0
  %471 = vmatpush1.msra.mxu0 0.0
  %472 = vmatprep.subr.mxu0 0.0
  %473 = vmatpush1.msra.mxu0 0.0
  %474 = vmatprep.subr.mxu0 0.0
  %475 = vmatpush1.msra.mxu0 0.0
  %476 = vmatprep.subr.mxu0 0.0
  %477 = vmatpush1.msra.mxu0 0.0
  %478 = vmatprep.subr.mxu0 0.0
  %479 = vmatpush1.msra.mxu0 0.0
  %480 = vmatprep.subr.mxu0 0.0
  %481 = vmatpush1.msra.mxu0 0.0
  %482 = vmatprep.subr.mxu0 0.0
  %483 = vmatpush1.msra.mxu0 0.0
  %484 = vmatprep.subr.mxu0 0.0
  %485 = vmatpush1.msra.mxu0 0.0
  %486 = vmatprep.subr.mxu0 0.0
  %487 = vmatpush1.msra.mxu0 0.0
  %488 = vmatprep.subr.mxu0 0.0
  %489 = vmatpush1.msra.mxu0 0.0
  %490 = vmatprep.subr.mxu0 0.0
  %491 = vmatpush1.msra.mxu0 0.0
  %492 = vmatprep.subr.mxu0 0.0
  %493 = vmatpush1.msra.mxu0 0.0
  %494 = vmatprep.mubr.f32.mxu0 0.0
  %495 = vmatmul.mubr.f32.gmra.mrb[0].mxu0 %v425
  %v496 = vpop.f32.mrb[0].mxu0
  %v497 = vadd.f32 0.0, %v496
  %v498 = vpop.f32.mrb[0].mxu0
  %499 = vmatprep.mubr.f32.mxu0 0.0
  %500 = vmatmul.mubr.f32.gmra.mrb[0].mxu0 %v428
  %v501 = vpop.f32.mrb[0].mxu0
  %v502 = vadd.f32 0.0, %v501
  %v503 = vpop.f32.mrb[0].mxu0
  %504 = vdwg.mxu0
  %506 = vset.pattern.permute.xlu0 0
  %507 = vperm.xlu0 %506, %v423
  %v508 = vpop.permute.xlu0 %507
  %v510 = vadd.f32 %v497, %v508
  %v511 = vtanh.pop %v510
  %v513 = vsel %vm37, %v421, 0
  %515 = vmatprep.subr.mxu0 0.0
  %516 = vmatpush1.msra.mxu0 %v511
  %517 = vmatprep.subr.mxu0 0.0
  %518 = vmatpush1.msra.mxu0 0.0
  %519 = vmatprep.subr.mxu0 0.0
  %520 = vmatpush1.msra.mxu0 0.0
  %521 = vmatprep.subr.mxu0 0.0
  %522 = vmatpush1.msra.mxu0 0.0
  %523 = vmatprep.subr.mxu0 0.0
  %524 = vmatpush1.msra.mxu0 0.0
  %525 = vmatprep.subr.mxu0 0.0
  %526 = vmatpush1.msra.mxu0 0.0
  %527 = vmatprep.subr.mxu0 0.0
  %528 = vmatpush1.msra.mxu0 0.0
  %529 = vmatprep.subr.mxu0 0.0
  %530 = vmatpush1.msra.mxu0 0.0
  %531 = vmatprep.subr.mxu0 0.0
  %532 = vmatpush1.msra.mxu0 0.0
  %533 = vmatprep.subr.mxu0 0.0
  %534 = vmatpush1.msra.mxu0 0.0
  %535 = vmatprep.subr.mxu0 0.0
  %536 = vmatpush1.msra.mxu0 0.0
  %537 = vmatprep.subr.mxu0 0.0
  %538 = vmatpush1.msra.mxu0 0.0
  %539 = vmatprep.subr.mxu0 0.0
  %540 = vmatpush1.msra.mxu0 0.0
  %541 = vmatprep.subr.mxu0 0.0
  %542 = vmatpush1.msra.mxu0 0.0
  %543 = vmatprep.subr.mxu0 0.0
  %544 = vmatpush1.msra.mxu0 0.0
  %545 = vmatprep.subr.mxu0 0.0
  %546 = vmatpush1.msra.mxu0 0.0
  %547 = vmatprep.subr.mxu0 0.0
  %548 = vmatpush1.msra.mxu0 0.0
  %549 = vmatprep.subr.mxu0 0.0
  %550 = vmatpush1.msra.mxu0 0.0
  %551 = vmatprep.subr.mxu0 0.0
  %552 = vmatpush1.msra.mxu0 0.0
  %553 = vmatprep.subr.mxu0 0.0
  %554 = vmatpush1.msra.mxu0 0.0
  %555 = vmatprep.subr.mxu0 0.0
  %556 = vmatpush1.msra.mxu0 0.0
  %557 = vmatprep.subr.mxu0 0.0
  %558 = vmatpush1.msra.mxu0 0.0
  %559 = vmatprep.subr.mxu0 0.0
  %560 = vmatpush1.msra.mxu0 0.0
  %561 = vmatprep.subr.mxu0 0.0
  %562 = vmatpush1.msra.mxu0 0.0
  %563 = vmatprep.subr.mxu0 0.0
  %564 = vmatpush1.msra.mxu0 0.0
  %565 = vmatprep.subr.mxu0 0.0
  %566 = vmatpush1.msra.mxu0 0.0
  %567 = vmatprep.subr.mxu0 0.0
  %568 = vmatpush1.msra.mxu0 0.0
  %569 = vmatprep.subr.mxu0 0.0
  %570 = vmatpush1.msra.mxu0 0.0
  %571 = vmatprep.subr.mxu0 0.0
  %572 = vmatpush1.msra.mxu0 0.0
  %573 = vmatprep.subr.mxu0 0.0
  %574 = vmatpush1.msra.mxu0 0.0
  %575 = vmatprep.subr.mxu0 0.0
  %576 = vmatpush1.msra.mxu0 0.0
  %577 = vmatprep.subr.mxu0 0.0
  %578 = vmatpush1.msra.mxu0 0.0
  %579 = vmatprep.mubr.f32.mxu0 0.0
  %580 = vmatmul.mubr.f32.gmra.mrb[0].mxu0 %v513
  %v581 = vpop.f32.mrb[0].mxu0
  %v582 = vadd.f32 0.0, %v581
  %v583 = vpop.f32.mrb[0].mxu0
  %584 = vdwg.mxu0
  %v585 = vadd.f32 %v502, %v582
  %s586 = scalar_lea.vmem %s1, 48
  %v587 = vld [vmem:[%s586] sm:$0xff]
  %v588 = vld [vmem:[%s586 + $0x8] sm:$0xff]
  %s589 = scalar_lea.vmem %s2, 24
  %v590 = vld [vmem:[%s589] sm:$0xff]
  %s591 = scalar_lea.vmem %s3, 24
  %v592 = vld [vmem:[%s591] sm:$0xff]
  %v594 = vsel %vm37, %v587, 0
  %v597 = vsel %vm37, %v588, 0
  %599 = vmatprep.subr.mxu0 0.0
  %600 = vmatpush1.msra.mxu0 %v585
  %601 = vmatprep.subr.mxu0 0.0
  %602 = vmatpush1.msra.mxu0 0.0
  %603 = vmatprep.subr.mxu0 0.0
  %604 = vmatpush1.msra.mxu0 0.0
  %605 = vmatprep.subr.mxu0 0.0
  %606 = vmatpush1.msra.mxu0 0.0
  %607 = vmatprep.subr.mxu0 0.0
  %608 = vmatpush1.msra.mxu0 0.0
  %609 = vmatprep.subr.mxu0 0.0
  %610 = vmatpush1.msra.mxu0 0.0
  %611 = vmatprep.subr.mxu0 0.0
  %612 = vmatpush1.msra.mxu0 0.0
  %613 = vmatprep.subr.mxu0 0.0
  %614 = vmatpush1.msra.mxu0 0.0
  %615 = vmatprep.subr.mxu0 0.0
  %616 = vmatpush1.msra.mxu0 0.0
  %617 = vmatprep.subr.mxu0 0.0
  %618 = vmatpush1.msra.mxu0 0.0
  %619 = vmatprep.subr.mxu0 0.0
  %620 = vmatpush1.msra.mxu0 0.0
  %621 = vmatprep.subr.mxu0 0.0
  %622 = vmatpush1.msra.mxu0 0.0
  %623 = vmatprep.subr.mxu0 0.0
  %624 = vmatpush1.msra.mxu0 0.0
  %625 = vmatprep.subr.mxu0 0.0
  %626 = vmatpush1.msra.mxu0 0.0
  %627 = vmatprep.subr.mxu0 0.0
  %628 = vmatpush1.msra.mxu0 0.0
  %629 = vmatprep.subr.mxu0 0.0
  %630 = vmatpush1.msra.mxu0 0.0
  %631 = vmatprep.subr.mxu0 0.0
  %632 = vmatpush1.msra.mxu0 0.0
  %633 = vmatprep.subr.mxu0 0.0
  %634 = vmatpush1.msra.mxu0 0.0
  %635 = vmatprep.subr.mxu0 0.0
  %636 = vmatpush1.msra.mxu0 0.0
  %637 = vmatprep.subr.mxu0 0.0
  %638 = vmatpush1.msra.mxu0 0.0
  %639 = vmatprep.subr.mxu0 0.0
  %640 = vmatpush1.msra.mxu0 0.0
  %641 = vmatprep.subr.mxu0 0.0
  %642 = vmatpush1.msra.mxu0 0.0
  %643 = vmatprep.subr.mxu0 0.0
  %644 = vmatpush1.msra.mxu0 0.0
  %645 = vmatprep.subr.mxu0 0.0
  %646 = vmatpush1.msra.mxu0 0.0
  %647 = vmatprep.subr.mxu0 0.0
  %648 = vmatpush1.msra.mxu0 0.0
  %649 = vmatprep.subr.mxu0 0.0
  %650 = vmatpush1.msra.mxu0 0.0
  %651 = vmatprep.subr.mxu0 0.0
  %652 = vmatpush1.msra.mxu0 0.0
  %653 = vmatprep.subr.mxu0 0.0
  %654 = vmatpush1.msra.mxu0 0.0
  %655 = vmatprep.subr.mxu0 0.0
  %656 = vmatpush1.msra.mxu0 0.0
  %657 = vmatprep.subr.mxu0 0.0
  %658 = vmatpush1.msra.mxu0 0.0
  %659 = vmatprep.subr.mxu0 0.0
  %660 = vmatpush1.msra.mxu0 0.0
  %661 = vmatprep.subr.mxu0 0.0
  %662 = vmatpush1.msra.mxu0 0.0
  %663 = vmatprep.mubr.f32.mxu0 0.0
  %664 = vmatmul.mubr.f32.gmra.mrb[0].mxu0 %v594
  %v665 = vpop.f32.mrb[0].mxu0
  %v666 = vadd.f32 0.0, %v665
  %v667 = vpop.f32.mrb[0].mxu0
  %668 = vmatprep.mubr.f32.mxu0 0.0
  %669 = vmatmul.mubr.f32.gmra.mrb[0].mxu0 %v597
  %v670 = vpop.f32.mrb[0].mxu0
  %v671 = vadd.f32 0.0, %v670
  %v672 = vpop.f32.mrb[0].mxu0
  %673 = vdwg.mxu0
  %675 = vset.pattern.permute.xlu0 0
  %676 = vperm.xlu0 %675, %v592
  %v677 = vpop.permute.xlu0 %676
  %v679 = vadd.f32 %v666, %v677
  %v680 = vtanh.pop %v679
  %v682 = vsel %vm37, %v590, 0
  %684 = vmatprep.subr.mxu0 0.0
  %685 = vmatpush1.msra.mxu0 %v680
  %686 = vmatprep.subr.mxu0 0.0
  %687 = vmatpush1.msra.mxu0 0.0
  %688 = vmatprep.subr.mxu0 0.0
  %689 = vmatpush1.msra.mxu0 0.0
  %690 = vmatprep.subr.mxu0 0.0
  %691 = vmatpush1.msra.mxu0 0.0
  %692 = vmatprep.subr.mxu0 0.0
  %693 = vmatpush1.msra.mxu0 0.0
  %694 = vmatprep.subr.mxu0 0.0
  %695 = vmatpush1.msra.mxu0 0.0
  %696 = vmatprep.subr.mxu0 0.0
  %697 = vmatpush1.msra.mxu0 0.0
  %698 = vmatprep.subr.mxu0 0.0
  %699 = vmatpush1.msra.mxu0 0.0
  %700 = vmatprep.subr.mxu0 0.0
  %701 = vmatpush1.msra.mxu0 0.0
  %702 = vmatprep.subr.mxu0 0.0
  %703 = vmatpush1.msra.mxu0 0.0
  %704 = vmatprep.subr.mxu0 0.0
  %705 = vmatpush1.msra.mxu0 0.0
  %706 = vmatprep.subr.mxu0 0.0
  %707 = vmatpush1.msra.mxu0 0.0
  %708 = vmatprep.subr.mxu0 0.0
  %709 = vmatpush1.msra.mxu0 0.0
  %710 = vmatprep.subr.mxu0 0.0
  %711 = vmatpush1.msra.mxu0 0.0
  %712 = vmatprep.subr.mxu0 0.0
  %713 = vmatpush1.msra.mxu0 0.0
  %714 = vmatprep.subr.mxu0 0.0
  %715 = vmatpush1.msra.mxu0 0.0
  %716 = vmatprep.subr.mxu0 0.0
  %717 = vmatpush1.msra.mxu0 0.0
  %718 = vmatprep.subr.mxu0 0.0
  %719 = vmatpush1.msra.mxu0 0.0
  %720 = vmatprep.subr.mxu0 0.0
  %721 = vmatpush1.msra.mxu0 0.0
  %722 = vmatprep.subr.mxu0 0.0
  %723 = vmatpush1.msra.mxu0 0.0
  %724 = vmatprep.subr.mxu0 0.0
  %725 = vmatpush1.msra.mxu0 0.0
  %726 = vmatprep.subr.mxu0 0.0
  %727 = vmatpush1.msra.mxu0 0.0
  %728 = vmatprep.subr.mxu0 0.0
  %729 = vmatpush1.msra.mxu0 0.0
  %730 = vmatprep.subr.mxu0 0.0
  %731 = vmatpush1.msra.mxu0 0.0
  %732 = vmatprep.subr.mxu0 0.0
  %733 = vmatpush1.msra.mxu0 0.0
  %734 = vmatprep.subr.mxu0 0.0
  %735 = vmatpush1.msra.mxu0 0.0
  %736 = vmatprep.subr.mxu0 0.0
  %737 = vmatpush1.msra.mxu0 0.0
  %738 = vmatprep.subr.mxu0 0.0
  %739 = vmatpush1.msra.mxu0 0.0
  %740 = vmatprep.subr.mxu0 0.0
  %741 = vmatpush1.msra.mxu0 0.0
  %742 = vmatprep.subr.mxu0 0.0
  %743 = vmatpush1.msra.mxu0 0.0
  %744 = vmatprep.subr.mxu0 0.0
  %745 = vmatpush1.msra.mxu0 0.0
  %746 = vmatprep.subr.mxu0 0.0
  %747 = vmatpush1.msra.mxu0 0.0
  %748 = vmatprep.mubr.f32.mxu0 0.0
  %749 = vmatmul.mubr.f32.gmra.mrb[0].mxu0 %v682
  %v750 = vpop.f32.mrb[0].mxu0
  %v751 = vadd.f32 0.0, %v750
  %v752 = vpop.f32.mrb[0].mxu0
  %753 = vdwg.mxu0
  %v754 = vadd.f32 %v671, %v751
  %755 = vst [vmem:[%s4] sm:$0xff] %v754
  // Predicated region
  $region18: #{h1_forward.1} parent=0 // pred_check
    _
  $region19: #{h1_forward.1} parent=0 // pred_check_branch
    %757 = sbr.rel (0) target = $region21
  $region20: #{h1_forward.1} parent=0 // pred_region
    _
  $region21: #{h1_forward.1} parent=0 // pred_fallthru
    _
  // Predicated region
  $region22: #{h1_forward.1} parent=0 // pred_check
    _
  $region23: #{h1_forward.1} parent=0 // pred_check_branch
    %759 = sbr.rel (0) target = $region25
  $region24: #{h1_forward.1} parent=0 // pred_region
    _
  $region25: #{h1_forward.1} parent=0 // pred_fallthru
    _

</llo_original>
